<compile_context>
chip_gen: v7x
topology: tpu7x:2x2x1
jax: 0.10.0
libtpu: 0.0.40
codegen_flags: <defaults>
</compile_context>

<pallas_src>
import jax
import jax.numpy as jnp
from jax.experimental import pallas as pl
from jax.experimental.pallas import tpu as pltpu


def _conv_block1_kernel(x_ref, w1_ref, b1_ref, w2_ref, b2_ref, o_ref):
    # x_ref : (C_in,  P)   one sample, pixels on the lane dim
    # w1_ref: (C_out, C_in)    b1_ref: (C_out, 1)
    # w2_ref: (C_out, C_out)   b2_ref: (C_out, 1)
    # o_ref : (C_out, P)
    h = jnp.dot(w1_ref[...], x_ref[...], preferred_element_type=jnp.float32)
    h = jnp.maximum(h + b1_ref[...], 0.0)          # conv1 + folded BN1 + ReLU
    y = jnp.dot(w2_ref[...], h, preferred_element_type=jnp.float32)
    y = jnp.maximum(y + b2_ref[...], 0.0)          # conv2 + folded BN2 + ReLU
    o_ref[...] = y.astype(o_ref.dtype)


def conv_block_1(x, params, *, eps=1e-5):
    """Forward pass of conv_block_1 (inference / eval-mode BatchNorm).

    x      : (N, C_in, H, W)  NCHW, matching the PyTorch module.
    params : dict with conv weights/biases and BN gamma/beta/mean/var.
    returns: (N, C_out, H, W)
    """
    N, C_in, H, W = x.shape
    C_out = params["w1"].shape[0]
    P = H * W

    # ---- fold eval-mode BatchNorm into the 1x1 conv weight / bias -----------
    def fold(w, b, gamma, beta, mean, var):
        scale = gamma / jnp.sqrt(var + eps)                       # (C_out,)
        w_f = w.reshape(w.shape[0], w.shape[1]) * scale[:, None]  # (C_out, C_in)
        b_f = scale * (b - mean) + beta                           # (C_out,)
        return w_f, b_f.reshape(-1, 1)

    w1, b1 = fold(params["w1"], params["b1"], params["g1"], params["be1"],
                  params["m1"], params["v1"])
    w2, b2 = fold(params["w2"], params["b2"], params["g2"], params["be2"],
                  params["m2"], params["v2"])

    # Zero-cost reshape: NCHW already has H*W contiguous last -> lane dim.
    x_flat = x.reshape(N, C_in, P)

    flops = 2 * N * P * (C_in * C_out + C_out * C_out)
    bytes_accessed = 4 * (x_flat.size + w1.size + b1.size + w2.size + b2.size
                          + N * C_out * P)

    y = pl.pallas_call(
        _conv_block1_kernel,
        out_shape=jax.ShapeDtypeStruct((N, C_out, P), x.dtype),
        grid_spec=pltpu.PrefetchScalarGridSpec(
            num_scalar_prefetch=0,
            grid=(N,),                                         # one sample / step
            in_specs=[
                pl.BlockSpec((None, C_in, P), lambda n: (n, 0, 0)),
                pl.BlockSpec((C_out, C_in), lambda n: (0, 0)),   # resident
                pl.BlockSpec((C_out, 1), lambda n: (0, 0)),      # resident
                pl.BlockSpec((C_out, C_out), lambda n: (0, 0)),  # resident
                pl.BlockSpec((C_out, 1), lambda n: (0, 0)),      # resident
            ],
            out_specs=pl.BlockSpec((None, C_out, P), lambda n: (n, 0, 0)),
        ),
        compiler_params=pltpu.CompilerParams(
            dimension_semantics=("parallel",)),
        cost_estimate=pl.CostEstimate(
            flops=flops, transcendentals=0, bytes_accessed=bytes_accessed),
    )(x_flat, w1, b1, w2, b2)

    # Zero-cost reshape back to NCHW — no transpose anywhere in the wrapper.
    return y.reshape(N, C_out, H, W)


def _reference(x, params, *, eps=1e-5):
    """Unfused JAX re-implementation of the PyTorch forward (eval-mode BN)."""
    def conv1x1(x, w, b):
        return jnp.einsum('oc,nchw->nohw', w[:, :, 0, 0], x) + b[None, :, None, None]

    def bn(x, g, be, m, v):
        return (x - m[None, :, None, None]) / jnp.sqrt(v[None, :, None, None] + eps) \
               * g[None, :, None, None] + be[None, :, None, None]

    h = jnp.maximum(bn(conv1x1(x, params["w1"], params["b1"]),
                       params["g1"], params["be1"], params["m1"], params["v1"]), 0.0)
    y = jnp.maximum(bn(conv1x1(h, params["w2"], params["b2"]),
                       params["g2"], params["be2"], params["m2"], params["v2"]), 0.0)
    return y


if __name__ == "__main__":
    key = jax.random.PRNGKey(0)
    N, C_in, C_out, H, W = 2, 4, 8, 16, 16
    ks = jax.random.split(key, 12)

    x = jax.random.normal(ks[0], (N, C_in, H, W), dtype=jnp.float32)

    # Deterministic synthetic parameters (Conv2d weight layout: (C_out, C_in, 1, 1)).
    bound1 = 1.0 / (C_in ** 0.5)
    bound2 = 1.0 / (C_out ** 0.5)
    params = dict(
        w1=jax.random.uniform(ks[1], (C_out, C_in, 1, 1), jnp.float32, -bound1, bound1),
        b1=jax.random.uniform(ks[2], (C_out,), jnp.float32, -bound1, bound1),
        g1=jax.random.uniform(ks[3], (C_out,), jnp.float32, 0.5, 1.5),
        be1=0.1 * jax.random.normal(ks[4], (C_out,), jnp.float32),
        m1=0.1 * jax.random.normal(ks[5], (C_out,), jnp.float32),
        v1=jax.random.uniform(ks[6], (C_out,), jnp.float32, 0.5, 1.5),
        w2=jax.random.uniform(ks[7], (C_out, C_out, 1, 1), jnp.float32, -bound2, bound2),
        b2=jax.random.uniform(ks[8], (C_out,), jnp.float32, -bound2, bound2),
        g2=jax.random.uniform(ks[9], (C_out,), jnp.float32, 0.5, 1.5),
        be2=0.1 * jax.random.normal(ks[10], (C_out,), jnp.float32),
        m2=0.1 * jax.random.normal(ks[11], (C_out,), jnp.float32),
        v2=jnp.linspace(0.6, 1.4, C_out, dtype=jnp.float32),
    )

    out = conv_block_1(x, params)
    out = jax.block_until_ready(out)

    ref = _reference(x, params)
    assert out.shape == (N, C_out, H, W)
    assert jnp.allclose(out, ref, atol=1e-5, rtol=1e-5), \
        float(jnp.max(jnp.abs(out - ref)))

    print("KERNEL_OK")
</pallas_src>

<mosaic_0001>
module attributes {stable_mosaic.version = 11 : i64} {
  func.func @_conv_block1_kernel(%arg0: i32, %arg1: memref<1x4x256xf32, #tpu.memory_space<vmem>>, %arg2: memref<8x4xf32, #tpu.memory_space<vmem>>, %arg3: memref<8x1xf32, #tpu.memory_space<vmem>>, %arg4: memref<8x8xf32, #tpu.memory_space<vmem>>, %arg5: memref<8x1xf32, #tpu.memory_space<vmem>>, %arg6: memref<1x8x256xf32, #tpu.memory_space<vmem>>) attributes {dimension_semantics = [#tpu.dimension_semantics<parallel>], iteration_bounds = array<i64: 2>, scalar_prefetch = 0 : i64, scratch_operands = 0 : i64, tpu.core_type = #tpu.core_type<tc>, window_params = [{transform_indices = @transform_0, window_bounds = array<i64: 1, 4, 256>}, {pipeline_mode = #tpu.pipeline_mode<synchronous>, transform_indices = @transform_1, window_bounds = array<i64: 8, 4>}, {pipeline_mode = #tpu.pipeline_mode<synchronous>, transform_indices = @transform_2, window_bounds = array<i64: 8, 1>}, {pipeline_mode = #tpu.pipeline_mode<synchronous>, transform_indices = @transform_3, window_bounds = array<i64: 8, 8>}, {pipeline_mode = #tpu.pipeline_mode<synchronous>, transform_indices = @transform_4, window_bounds = array<i64: 8, 1>}, {transform_indices = @transform_5, window_bounds = array<i64: 1, 8, 256>}]} {
    %c0 = arith.constant 0 : index
    %c0_0 = arith.constant 0 : index
    %0 = vector.load %arg2[%c0, %c0_0] : memref<8x4xf32, #tpu.memory_space<vmem>>, vector<8x4xf32>
    %c0_1 = arith.constant 0 : index
    %c0_2 = arith.constant 0 : index
    %c0_3 = arith.constant 0 : index
    %1 = vector.load %arg1[%c0_1, %c0_2, %c0_3] : memref<1x4x256xf32, #tpu.memory_space<vmem>>, vector<1x4x256xf32>
    %2 = vector.shape_cast %1 : vector<1x4x256xf32> to vector<4x256xf32>
    %cst = arith.constant dense<0.000000e+00> : vector<8x256xf32>
    %3 = tpu.matmul %0, %2, %cst {dimension_numbers = #tpu.dot_dimension_numbers<[1], [0], [0], [1], [0, 0, 1, 1], [], []>} : vector<8x4xf32>, vector<4x256xf32>, vector<8x256xf32> -> vector<8x256xf32>
    %c0_4 = arith.constant 0 : index
    %c0_5 = arith.constant 0 : index
    %4 = vector.load %arg3[%c0_4, %c0_5] : memref<8x1xf32, #tpu.memory_space<vmem>>, vector<8x1xf32>
    %5 = vector.broadcast %4 : vector<8x1xf32> to vector<8x256xf32>
    %6 = arith.addf %3, %5 : vector<8x256xf32>
    %cst_6 = arith.constant 0.000000e+00 : f32
    %7 = vector.broadcast %cst_6 : f32 to vector<8x256xf32>
    %8 = arith.maximumf %6, %7 : vector<8x256xf32>
    %c0_7 = arith.constant 0 : index
    %c0_8 = arith.constant 0 : index
    %9 = vector.load %arg4[%c0_7, %c0_8] : memref<8x8xf32, #tpu.memory_space<vmem>>, vector<8x8xf32>
    %cst_9 = arith.constant dense<0.000000e+00> : vector<8x256xf32>
    %10 = tpu.matmul %9, %8, %cst_9 {dimension_numbers = #tpu.dot_dimension_numbers<[1], [0], [0], [1], [0, 0, 1, 1], [], []>} : vector<8x8xf32>, vector<8x256xf32>, vector<8x256xf32> -> vector<8x256xf32>
    %c0_10 = arith.constant 0 : index
    %c0_11 = arith.constant 0 : index
    %11 = vector.load %arg5[%c0_10, %c0_11] : memref<8x1xf32, #tpu.memory_space<vmem>>, vector<8x1xf32>
    %12 = vector.broadcast %11 : vector<8x1xf32> to vector<8x256xf32>
    %13 = arith.addf %10, %12 : vector<8x256xf32>
    %cst_12 = arith.constant 0.000000e+00 : f32
    %14 = vector.broadcast %cst_12 : f32 to vector<8x256xf32>
    %15 = arith.maximumf %13, %14 : vector<8x256xf32>
    %c0_13 = arith.constant 0 : index
    %c0_14 = arith.constant 0 : index
    %c0_15 = arith.constant 0 : index
    %16 = vector.load %arg6[%c0_13, %c0_14, %c0_15] : memref<1x8x256xf32, #tpu.memory_space<vmem>>, vector<1x8x256xf32>
    %17 = vector.shape_cast %16 : vector<1x8x256xf32> to vector<8x256xf32>
    %18 = vector.shape_cast %15 : vector<8x256xf32> to vector<1x8x256xf32>
    tpu.vector_store %arg6[%c0_13, %c0_14, %c0_15], %18 {strides = array<i32>} : memref<1x8x256xf32, #tpu.memory_space<vmem>>, vector<1x8x256xf32>,
    return
  }
  func.func @transform_0(%arg0: i32) -> (i32, i32, i32) {
    %c0_i32 = arith.constant 0 : i32
    %c0_i32_0 = arith.constant 0 : i32
    %c0_i32_1 = arith.constant 0 : i32
    return %arg0, %c0_i32, %c0_i32_0 : i32, i32, i32
  }
  func.func @transform_1(%arg0: i32) -> (i32, i32) {
    %c0_i32 = arith.constant 0 : i32
    %c0_i32_0 = arith.constant 0 : i32
    %c0_i32_1 = arith.constant 0 : i32
    return %c0_i32, %c0_i32_0 : i32, i32
  }
  func.func @transform_2(%arg0: i32) -> (i32, i32) {
    %c0_i32 = arith.constant 0 : i32
    %c0_i32_0 = arith.constant 0 : i32
    %c0_i32_1 = arith.constant 0 : i32
    return %c0_i32, %c0_i32_0 : i32, i32
  }
  func.func @transform_3(%arg0: i32) -> (i32, i32) {
    %c0_i32 = arith.constant 0 : i32
    %c0_i32_0 = arith.constant 0 : i32
    %c0_i32_1 = arith.constant 0 : i32
    return %c0_i32, %c0_i32_0 : i32, i32
  }
  func.func @transform_4(%arg0: i32) -> (i32, i32) {
    %c0_i32 = arith.constant 0 : i32
    %c0_i32_0 = arith.constant 0 : i32
    %c0_i32_1 = arith.constant 0 : i32
    return %c0_i32, %c0_i32_0 : i32, i32
  }
  func.func @transform_5(%arg0: i32) -> (i32, i32, i32) {
    %c0_i32 = arith.constant 0 : i32
    %c0_i32_0 = arith.constant 0 : i32
    %c0_i32_1 = arith.constant 0 : i32
    return %arg0, %c0_i32, %c0_i32_0 : i32, i32, i32
  }
}

</mosaic_0001>

<llo_original>
// kernel: tpu_custom_call.1
$region0: #{tpu_custom_call.1}
  #allocation0 [shape = 'u32[]', space=smem, size = 0x4, offset = 0x4, fixed_abs, tag = 'smem constant byte address 0x4 - core index']
  #allocation1 [shape = 'u32[144,128]{1,0:T(1,128)}', space=vmem, size = 0x12000, scoped, tag = 'internal scratch']
  %s0 = inlined_call_operand.vmem [shape: f32[2,4,256], index: 0, kind: input, shape index: {}]
  %s1 = inlined_call_operand.vmem [shape: f32[8,4], index: 1, kind: input, shape index: {}]
  %s2 = inlined_call_operand.vmem [shape: f32[8,1], index: 2, kind: input, shape index: {}]
  %s3 = inlined_call_operand.vmem [shape: f32[8,8], index: 3, kind: input, shape index: {}]
  %s4 = inlined_call_operand.vmem [shape: f32[8,1], index: 4, kind: input, shape index: {}]
  %s5 = inlined_call_operand.hbm [shape: f32[2,8,256], index: 5, kind: output, shape index: {}]
  %s6 = sld [smem:[#allocation0]]
  $region53: #{tpu_custom_call.1} parent=0
    _
  %s8 = ssub.s32 1, %s6
  %s9 = scalar_select 0, %s8, %s6
  $region1: #{tpu_custom_call.1} parent=0
    #allocation2 [shape = 'u8[16384]{0}', space=vmem, size = 0x4000, scoped, tag = 'output window, operand 0']
    #allocation3 [shape = 's32[2]{0}', space=sflag, size = 0x8, scoped, tag = 'scoped memory for tpu_custom_call.1']
    %10 = vsyncpa [#allocation3], 0
    %s11 = scalar_lea.sflag [#allocation3], 1
    %12 = vsyncpa %s11, 0
    loop: start=0, step=1, limit=4
    $region2: #{tpu_custom_call.1} parent=1 // loop_pre_header
      _
    $region3: #{tpu_custom_call.1} parent=1 // loop_header
      %s14 = sphi 0, %s18
      %p15 = scmp.ge.s32.totalorder %s14, 4
      %s24 = sphi 0, %s26
      %s27 = sphi 0, %s24
      %s28 = sphi 0, %s27
      %s44 = sphi 0, %s28
      %s48 = sphi 0, %s48
      %s50 = sphi 0, %s48
      %s51 = sphi 0, %s50
      %s65 = sphi 0, %s51
      %s69 = sphi 0, %s69
      %s71 = sphi 0, %s69
      %s72 = sphi 0, %s71
      %s86 = sphi 0, %s72
      %s90 = sphi 0, %s90
      %s92 = sphi 0, %s90
      %s93 = sphi 0, %s92
      %s107 = sphi 0, %s93
      %s111 = sphi 0, %s111
      %s113 = sphi 0, %s111
      %s114 = sphi 0, %s113
      %s128 = sphi 0, %s114
      %s134 = sphi 0, %s136
      %s137 = sphi 0, %s134
      %s138 = sphi 0, %s137
      %s154 = sphi 0, %s138
    $region4: #{tpu_custom_call.1} parent=1 // loop_header_branch
      %17 = sbr.rel (%p15) target = $region8
    $region5: #{tpu_custom_call.1} parent=1 // loop_body
      %s19 = ssub.s32 %s14, 1
      %s20 = ssub.s32 %s14, 2
      %s21 = sadd.s32 %s14, 1
      %s22 = ssub.s32 %s14, %s21
      %p23 = scmp.eq.s32.totalorder %s22, 0
      %s25 = sadd.s32 %s24, 1
      %s26 = scalar_select %p23, %s24, %s25
      %p29 = pneg %p23
      %p30 = scmp.eq.s32.totalorder %s14, 1
      %p31 = por %p29, %p30
      %p32 = scmp.ne.s32.totalorder %s24, %s27
      %p33 = scmp.eq.s32.totalorder %s14, 0
      %p34 = por %p32, %p33
      %p35 = scmp.ne.s32.totalorder %s24, %s27
      %p36 = scmp.eq.s32.totalorder %s19, 1
      %p37 = por %p35, %p36
      %p38 = scmp.ne.s32.totalorder %s27, %s28
      %p39 = scmp.eq.s32.totalorder %s19, 0
      %p40 = por %p38, %p39
      %p41 = scmp.ne.s32.totalorder %s27, %s28
      %p42 = scmp.eq.s32.totalorder %s20, 1
      %p43 = por %p41, %p42
      %p45 = scmp.ne.s32.totalorder %s28, %s44
      %p46 = scmp.eq.s32.totalorder %s20, 0
      %p47 = por %p45, %p46
      %s49 = sadd.s32 %s48, 1
      %p52 = scmp.eq.s32.totalorder %s14, 1
      %p53 = scmp.ne.s32.totalorder %s48, %s50
      %p54 = scmp.eq.s32.totalorder %s14, 0
      %p55 = por %p53, %p54
      %p56 = scmp.ne.s32.totalorder %s48, %s50
      %p57 = scmp.eq.s32.totalorder %s19, 1
      %p58 = por %p56, %p57
      %p59 = scmp.ne.s32.totalorder %s50, %s51
      %p60 = scmp.eq.s32.totalorder %s19, 0
      %p61 = por %p59, %p60
      %p62 = scmp.ne.s32.totalorder %s50, %s51
      %p63 = scmp.eq.s32.totalorder %s20, 1
      %p64 = por %p62, %p63
      %p66 = scmp.ne.s32.totalorder %s51, %s65
      %p67 = scmp.eq.s32.totalorder %s20, 0
      %p68 = por %p66, %p67
      %s70 = sadd.s32 %s69, 1
      %p73 = scmp.eq.s32.totalorder %s14, 1
      %p74 = scmp.ne.s32.totalorder %s69, %s71
      %p75 = scmp.eq.s32.totalorder %s14, 0
      %p76 = por %p74, %p75
      %p77 = scmp.ne.s32.totalorder %s69, %s71
      %p78 = scmp.eq.s32.totalorder %s19, 1
      %p79 = por %p77, %p78
      %p80 = scmp.ne.s32.totalorder %s71, %s72
      %p81 = scmp.eq.s32.totalorder %s19, 0
      %p82 = por %p80, %p81
      %p83 = scmp.ne.s32.totalorder %s71, %s72
      %p84 = scmp.eq.s32.totalorder %s20, 1
      %p85 = por %p83, %p84
      %p87 = scmp.ne.s32.totalorder %s72, %s86
      %p88 = scmp.eq.s32.totalorder %s20, 0
      %p89 = por %p87, %p88
      %s91 = sadd.s32 %s90, 1
      %p94 = scmp.eq.s32.totalorder %s14, 1
      %p95 = scmp.ne.s32.totalorder %s90, %s92
      %p96 = scmp.eq.s32.totalorder %s14, 0
      %p97 = por %p95, %p96
      %p98 = scmp.ne.s32.totalorder %s90, %s92
      %p99 = scmp.eq.s32.totalorder %s19, 1
      %p100 = por %p98, %p99
      %p101 = scmp.ne.s32.totalorder %s92, %s93
      %p102 = scmp.eq.s32.totalorder %s19, 0
      %p103 = por %p101, %p102
      %p104 = scmp.ne.s32.totalorder %s92, %s93
      %p105 = scmp.eq.s32.totalorder %s20, 1
      %p106 = por %p104, %p105
      %p108 = scmp.ne.s32.totalorder %s93, %s107
      %p109 = scmp.eq.s32.totalorder %s20, 0
      %p110 = por %p108, %p109
      %s112 = sadd.s32 %s111, 1
      %p115 = scmp.eq.s32.totalorder %s14, 1
      %p116 = scmp.ne.s32.totalorder %s111, %s113
      %p117 = scmp.eq.s32.totalorder %s14, 0
      %p118 = por %p116, %p117
      %p119 = scmp.ne.s32.totalorder %s111, %s113
      %p120 = scmp.eq.s32.totalorder %s19, 1
      %p121 = por %p119, %p120
      %p122 = scmp.ne.s32.totalorder %s113, %s114
      %p123 = scmp.eq.s32.totalorder %s19, 0
      %p124 = por %p122, %p123
      %p125 = scmp.ne.s32.totalorder %s113, %s114
      %p126 = scmp.eq.s32.totalorder %s20, 1
      %p127 = por %p125, %p126
      %p129 = scmp.ne.s32.totalorder %s114, %s128
      %p130 = scmp.eq.s32.totalorder %s20, 0
      %p131 = por %p129, %p130
      %s132 = ssub.s32 %s14, %s21
      %p133 = scmp.eq.s32.totalorder %s132, 0
      %s135 = sadd.s32 %s134, 1
      %s136 = scalar_select %p133, %s134, %s135
      %p139 = pneg %p133
      %p140 = scmp.eq.s32.totalorder %s14, 1
      %p141 = por %p139, %p140
      %p142 = scmp.ne.s32.totalorder %s134, %s137
      %p143 = scmp.eq.s32.totalorder %s14, 0
      %p144 = por %p142, %p143
      %p145 = scmp.ne.s32.totalorder %s134, %s137
      %p146 = scmp.eq.s32.totalorder %s19, 1
      %p147 = por %p145, %p146
      %p148 = scmp.ne.s32.totalorder %s137, %s138
      %p149 = scmp.eq.s32.totalorder %s19, 0
      %p150 = por %p148, %p149
      %p151 = scmp.ne.s32.totalorder %s137, %s138
      %p152 = scmp.eq.s32.totalorder %s20, 1
      %p153 = por %p151, %p152
      %p155 = scmp.ne.s32.totalorder %s138, %s154
      %p156 = scmp.eq.s32.totalorder %s20, 0
      %p157 = por %p155, %p156
      %p158 = scmp.le.s32.totalorder 1, %s14
      %p159 = scmp.lt.s32.totalorder %s14, 3
      %p160 = pnand %p158, %p159
      %p161 = pneg %p160
      // Predicated region
      $region9: #{tpu_custom_call.1} parent=5 // pred_check
        _
      $region10: #{tpu_custom_call.1} parent=5 // pred_check_branch
        %163 = sbr.rel (%p160) target = $region12
      $region11: #{tpu_custom_call.1} parent=5 // pred_region
        %s164 = ssub.s32 %s14, 1
        // Predicated region
        $region13: #{tpu_custom_call.1} parent=11 // pred_check
          %p165 = pneg %p61
        $region14: #{tpu_custom_call.1} parent=11 // pred_check_branch
          %167 = sbr.rel (%p165) target = $region16
        $region15: #{tpu_custom_call.1} parent=11 // pred_region
          _
        $region16: #{tpu_custom_call.1} parent=11 // pred_fallthru
          _
        // Predicated region
        $region17: #{tpu_custom_call.1} parent=11 // pred_check
          %p168 = pneg %p82
        $region18: #{tpu_custom_call.1} parent=11 // pred_check_branch
          %170 = sbr.rel (%p168) target = $region20
        $region19: #{tpu_custom_call.1} parent=11 // pred_region
          _
        $region20: #{tpu_custom_call.1} parent=11 // pred_fallthru
          _
        // Predicated region
        $region21: #{tpu_custom_call.1} parent=11 // pred_check
          %p171 = pneg %p103
        $region22: #{tpu_custom_call.1} parent=11 // pred_check_branch
          %173 = sbr.rel (%p171) target = $region24
        $region23: #{tpu_custom_call.1} parent=11 // pred_region
          _
        $region24: #{tpu_custom_call.1} parent=11 // pred_fallthru
          _
        // Predicated region
        $region25: #{tpu_custom_call.1} parent=11 // pred_check
          %p174 = pneg %p124
        $region26: #{tpu_custom_call.1} parent=11 // pred_check_branch
          %176 = sbr.rel (%p174) target = $region28
        $region27: #{tpu_custom_call.1} parent=11 // pred_region
          _
        $region28: #{tpu_custom_call.1} parent=11 // pred_fallthru
          _
      $region12: #{tpu_custom_call.1} parent=5 // pred_fallthru
        _
      %p177 = scmp.lt.s32.totalorder %s14, 2
      // Predicated region
      $region29: #{tpu_custom_call.1} parent=5 // pred_check
        %p178 = pneg %p177
      $region30: #{tpu_custom_call.1} parent=5 // pred_check_branch
        %180 = sbr.rel (%p178) target = $region32
      $region31: #{tpu_custom_call.1} parent=5 // pred_region
        // Predicated region
        $region33: #{tpu_custom_call.1} parent=31 // pred_check
          %p181 = pneg %p34
        $region34: #{tpu_custom_call.1} parent=31 // pred_check_branch
          %183 = sbr.rel (%p181) target = $region36
        $region35: #{tpu_custom_call.1} parent=31 // pred_region
          %p184 = scmp.lt.s32.totalorder %s14, 1
          %s185 = scalar_select %p184, %s14, 1
          %s186 = smul.addr %s185, 2
          %s187 = smul.addr %s186, 4
          %s188 = scalar_lea.vmem %s0, %s187
        $region36: #{tpu_custom_call.1} parent=31 // pred_fallthru
          _
      $region32: #{tpu_custom_call.1} parent=5 // pred_fallthru
        _
      %p189 = scmp.le.s32.totalorder 1, %s14
      %p190 = scmp.lt.s32.totalorder %s14, 3
      %p191 = pnand %p189, %p190
      %p192 = pneg %p191
      // Predicated region
      $region37: #{tpu_custom_call.1} parent=5 // pred_check
        _
      $region38: #{tpu_custom_call.1} parent=5 // pred_check_branch
        %194 = sbr.rel (%p191) target = $region40
      $region39: #{tpu_custom_call.1} parent=5 // pred_region
        %s195 = ssub.s32 %s14, 1
        %p196 = scmp.lt.s32.totalorder %s19, 1
        %s197 = scalar_select %p196, %s19, 1
        %s198 = smul.addr %s197, 2
        %s199 = smul.addr %s198, 4
        %s200 = scalar_lea.vmem %s0, %s199
        %p201 = pneg %p40
        %p202 = pneg %p37
        %p203 = pneg %p61
        %p204 = pneg %p58
        %p205 = pneg %p82
        %p206 = pneg %p79
        %p207 = pneg %p103
        %p208 = pneg %p100
        %p209 = pneg %p124
        %p210 = pneg %p121
        %p211 = pneg %p150
        %p212 = pneg %p147
        %s213 = sand.u32 %s137, 1
        %s214 = scalar_lea.sflag [#allocation3], %s213
        %s215 = sand.u32 %s137, 1
        %s216 = smul.addr %s215, 16
        %s217 = scalar_lea.vmem [#allocation2], %s216
        %p218 = scmp.lt.s32.totalorder %s19, 1
        %s219 = scalar_select %p218, %s19, 1
        %s220 = smul.addr %s219, 2
        %s221 = smul.addr %s220, 4
        %s222 = scalar_lea.vmem %s0, %s221
        %v223 = vld [vmem:[%s1] sm:$0xff]
        %v224 = vld [vmem:[%s222] sm:$0xff]
        %v225 = vld [vmem:[%s2] sm:$0xff]
        %227 = vset.pattern.permute.xlu0 0
        %228 = vperm.xlu0 %227, %v225
        %v229 = vpop.permute.xlu0 %228
        %v232 = vcombine.high %v224, %v224
        %vm233 = vcmask 31744
        %v235 = vsel %vm233, %v223, 0
        %vm237 = vcmask 1043456
        %v238 = vsel %vm237, %v224, 0
        %v240 = vsel %vm237, %v232, 0
        %242 = vmatprep.subr.mxu0 %v240
        %243 = vmatpush1.msra.mxu0 %v238
        %244 = vmatprep.subr.mxu0 0.0
        %245 = vmatpush1.msra.mxu0 0.0
        %246 = vmatprep.subr.mxu0 0.0
        %247 = vmatpush1.msra.mxu0 0.0
        %248 = vmatprep.subr.mxu0 0.0
        %249 = vmatpush1.msra.mxu0 0.0
        %250 = vmatprep.subr.mxu0 0.0
        %251 = vmatpush1.msra.mxu0 0.0
        %252 = vmatprep.subr.mxu0 0.0
        %253 = vmatpush1.msra.mxu0 0.0
        %254 = vmatprep.subr.mxu0 0.0
        %255 = vmatpush1.msra.mxu0 0.0
        %256 = vmatprep.subr.mxu0 0.0
        %257 = vmatpush1.msra.mxu0 0.0
        %258 = vmatprep.subr.mxu0 0.0
        %259 = vmatpush1.msra.mxu0 0.0
        %260 = vmatprep.subr.mxu0 0.0
        %261 = vmatpush1.msra.mxu0 0.0
        %262 = vmatprep.subr.mxu0 0.0
        %263 = vmatpush1.msra.mxu0 0.0
        %264 = vmatprep.subr.mxu0 0.0
        %265 = vmatpush1.msra.mxu0 0.0
        %266 = vmatprep.subr.mxu0 0.0
        %267 = vmatpush1.msra.mxu0 0.0
        %268 = vmatprep.subr.mxu0 0.0
        %269 = vmatpush1.msra.mxu0 0.0
        %270 = vmatprep.subr.mxu0 0.0
        %271 = vmatpush1.msra.mxu0 0.0
        %272 = vmatprep.subr.mxu0 0.0
        %273 = vmatpush1.msra.mxu0 0.0
        %274 = vmatprep.subr.mxu0 0.0
        %275 = vmatpush1.msra.mxu0 0.0
        %276 = vmatprep.subr.mxu0 0.0
        %277 = vmatpush1.msra.mxu0 0.0
        %278 = vmatprep.subr.mxu0 0.0
        %279 = vmatpush1.msra.mxu0 0.0
        %280 = vmatprep.subr.mxu0 0.0
        %281 = vmatpush1.msra.mxu0 0.0
        %282 = vmatprep.subr.mxu0 0.0
        %283 = vmatpush1.msra.mxu0 0.0
        %284 = vmatprep.subr.mxu0 0.0
        %285 = vmatpush1.msra.mxu0 0.0
        %286 = vmatprep.subr.mxu0 0.0
        %287 = vmatpush1.msra.mxu0 0.0
        %288 = vmatprep.subr.mxu0 0.0
        %289 = vmatpush1.msra.mxu0 0.0
        %290 = vmatprep.subr.mxu0 0.0
        %291 = vmatpush1.msra.mxu0 0.0
        %292 = vmatprep.subr.mxu0 0.0
        %293 = vmatpush1.msra.mxu0 0.0
        %294 = vmatprep.subr.mxu0 0.0
        %295 = vmatpush1.msra.mxu0 0.0
        %296 = vmatprep.subr.mxu0 0.0
        %297 = vmatpush1.msra.mxu0 0.0
        %298 = vmatprep.subr.mxu0 0.0
        %299 = vmatpush1.msra.mxu0 0.0
        %300 = vmatprep.subr.mxu0 0.0
        %301 = vmatpush1.msra.mxu0 0.0
        %302 = vmatprep.subr.mxu0 0.0
        %303 = vmatpush1.msra.mxu0 0.0
        %304 = vmatprep.subr.mxu0 0.0
        %305 = vmatpush1.msra.mxu0 0.0
        %306 = vmatprep.mubr.f32.mxu0 0.0
        %307 = vmatmul.mubr.f32.gmra.mrb[0].mxu0 %v235
        %v308 = vpop.f32.mrb[0].mxu0
        %v309 = vadd.f32 %v229, %v308
        %v310 = vpop.f32.mrb[0].mxu0
        %v311 = vadd.f32 %v229, %v310
        %312 = vdwg.mxu0
        %v313 = vmax.f32 %v309, 0.0
        %v314 = vmax.f32 %v311, 0.0
        %v315 = vld [vmem:[%s3] sm:$0xff]
        %v316 = vld [vmem:[%s4] sm:$0xff]
        %318 = vset.pattern.permute.xlu0 0
        %319 = vperm.xlu0 %318, %v316
        %v320 = vpop.permute.xlu0 %319
        %vm322 = vcmask 64512
        %v324 = vsel %vm322, %v315, 0
        %326 = vmatprep.subr.mxu0 %v314
        %327 = vmatpush1.msra.mxu0 %v313
        %328 = vmatprep.subr.mxu0 0.0
        %329 = vmatpush1.msra.mxu0 0.0
        %330 = vmatprep.subr.mxu0 0.0
        %331 = vmatpush1.msra.mxu0 0.0
        %332 = vmatprep.subr.mxu0 0.0
        %333 = vmatpush1.msra.mxu0 0.0
        %334 = vmatprep.subr.mxu0 0.0
        %335 = vmatpush1.msra.mxu0 0.0
        %336 = vmatprep.subr.mxu0 0.0
        %337 = vmatpush1.msra.mxu0 0.0
        %338 = vmatprep.subr.mxu0 0.0
        %339 = vmatpush1.msra.mxu0 0.0
        %340 = vmatprep.subr.mxu0 0.0
        %341 = vmatpush1.msra.mxu0 0.0
        %342 = vmatprep.subr.mxu0 0.0
        %343 = vmatpush1.msra.mxu0 0.0
        %344 = vmatprep.subr.mxu0 0.0
        %345 = vmatpush1.msra.mxu0 0.0
        %346 = vmatprep.subr.mxu0 0.0
        %347 = vmatpush1.msra.mxu0 0.0
        %348 = vmatprep.subr.mxu0 0.0
        %349 = vmatpush1.msra.mxu0 0.0
        %350 = vmatprep.subr.mxu0 0.0
        %351 = vmatpush1.msra.mxu0 0.0
        %352 = vmatprep.subr.mxu0 0.0
        %353 = vmatpush1.msra.mxu0 0.0
        %354 = vmatprep.subr.mxu0 0.0
        %355 = vmatpush1.msra.mxu0 0.0
        %356 = vmatprep.subr.mxu0 0.0
        %357 = vmatpush1.msra.mxu0 0.0
        %358 = vmatprep.subr.mxu0 0.0
        %359 = vmatpush1.msra.mxu0 0.0
        %360 = vmatprep.subr.mxu0 0.0
        %361 = vmatpush1.msra.mxu0 0.0
        %362 = vmatprep.subr.mxu0 0.0
        %363 = vmatpush1.msra.mxu0 0.0
        %364 = vmatprep.subr.mxu0 0.0
        %365 = vmatpush1.msra.mxu0 0.0
        %366 = vmatprep.subr.mxu0 0.0
        %367 = vmatpush1.msra.mxu0 0.0
        %368 = vmatprep.subr.mxu0 0.0
        %369 = vmatpush1.msra.mxu0 0.0
        %370 = vmatprep.subr.mxu0 0.0
        %371 = vmatpush1.msra.mxu0 0.0
        %372 = vmatprep.subr.mxu0 0.0
        %373 = vmatpush1.msra.mxu0 0.0
        %374 = vmatprep.subr.mxu0 0.0
        %375 = vmatpush1.msra.mxu0 0.0
        %376 = vmatprep.subr.mxu0 0.0
        %377 = vmatpush1.msra.mxu0 0.0
        %378 = vmatprep.subr.mxu0 0.0
        %379 = vmatpush1.msra.mxu0 0.0
        %380 = vmatprep.subr.mxu0 0.0
        %381 = vmatpush1.msra.mxu0 0.0
        %382 = vmatprep.subr.mxu0 0.0
        %383 = vmatpush1.msra.mxu0 0.0
        %384 = vmatprep.subr.mxu0 0.0
        %385 = vmatpush1.msra.mxu0 0.0
        %386 = vmatprep.subr.mxu0 0.0
        %387 = vmatpush1.msra.mxu0 0.0
        %388 = vmatprep.subr.mxu0 0.0
        %389 = vmatpush1.msra.mxu0 0.0
        %390 = vmatprep.mubr.f32.mxu0 0.0
        %391 = vmatmul.mubr.f32.gmra.mrb[0].mxu0 %v324
        %v392 = vpop.f32.mrb[0].mxu0
        %v393 = vadd.f32 %v320, %v392
        %v394 = vpop.f32.mrb[0].mxu0
        %v395 = vadd.f32 %v320, %v394
        %396 = vdwg.mxu0
        %v397 = vmax.f32 %v393, 0.0
        %v398 = vmax.f32 %v395, 0.0
        %399 = vst [vmem:[%s217] sm:$0xff] %v397
        %400 = vst [vmem:[%s217 + $0x8] sm:$0xff] %v398
        %s401 = sand.u32 %s137, 1
        %s402 = scalar_lea.sflag [#allocation3], %s401
        %s403 = sand.u32 %s137, 1
        %s404 = smul.addr %s403, 16
        %s405 = scalar_lea.vmem [#allocation2], %s404
        // Predicated region
        $region41: #{tpu_custom_call.1} parent=39 // pred_check
          %p406 = pneg %p147
        $region42: #{tpu_custom_call.1} parent=39 // pred_check_branch
          %408 = sbr.rel (%p406) target = $region44
        $region43: #{tpu_custom_call.1} parent=39 // pred_region
          %s410 = ssub.s32 256, 256
          %411 = vsyncadd %s402, %s410
          %s412 = smul.addr %s19, 2
          %s413 = smul.addr %s412, 128
          %s414 = scalar_lea.hbm %s5, %s413
          %s416 = sshll.u32 %s405, 4
          %s417 = int_to_ptr.vmem [resolvable:$true] %s416
          %419 = dma.vmem_to_hbm [thread:$0]  %s417, 256, %s414, %s402
        $region44: #{tpu_custom_call.1} parent=39 // pred_fallthru
          _
      $region40: #{tpu_custom_call.1} parent=5 // pred_fallthru
        _
      %p420 = scmp.le.s32.totalorder 2, %s14
      // Predicated region
      $region45: #{tpu_custom_call.1} parent=5 // pred_check
        %p421 = pneg %p420
      $region46: #{tpu_custom_call.1} parent=5 // pred_check_branch
        %423 = sbr.rel (%p421) target = $region48
      $region47: #{tpu_custom_call.1} parent=5 // pred_region
        %s424 = ssub.s32 %s14, 2
        // Predicated region
        $region49: #{tpu_custom_call.1} parent=47 // pred_check
          %p425 = pneg %p153
        $region50: #{tpu_custom_call.1} parent=47 // pred_check_branch
          %427 = sbr.rel (%p425) target = $region52
        $region51: #{tpu_custom_call.1} parent=47 // pred_region
          %s428 = sand.u32 %s138, 1
          %s429 = scalar_lea.sflag [#allocation3], %s428
          %s430 = sand.u32 %s138, 1
          %s431 = smul.addr %s430, 16
          %s432 = scalar_lea.vmem [#allocation2], %s431
          %433 = dma.done %s429, 256
        $region52: #{tpu_custom_call.1} parent=47 // pred_fallthru
          _
      $region48: #{tpu_custom_call.1} parent=5 // pred_fallthru
        _
    $region6: #{tpu_custom_call.1} parent=1 // loop_footer
      %s18 = sadd.s32 1, %s14
    $region7: #{tpu_custom_call.1} parent=1 // loop_footer_branch
      %13 = sbr.rel target = $region3
    $region8: #{tpu_custom_call.1} parent=1 // loop_exit
      _
    %434 = vsyncpa [#allocation3], 1
    %s435 = scalar_lea.sflag [#allocation3], 1
    %436 = vsyncpa %s435, 1

</llo_original>
